<compile_context>
chip_gen: v5e
topology: v5e:2x2
jax: 0.10.0
libtpu: 0.0.40
codegen_flags: <defaults>
</compile_context>

<pallas_src>
import jax
import jax.numpy as jnp
from jax.experimental import pallas as pl
from jax.experimental.pallas import tpu as pltpu

LANE = 128          # class dim padded to this lane width
TILE_B_MIN = 8      # sublane-aligned minimum batch tile
TILE_B_MAX = 128    # cap so weight tiles + x tiles stay comfortably inside VMEM
X_TILE_VMEM_BUDGET = 8 << 20   # bytes allowed for the double-buffered x tile


# ----------------------------------------------------------------------------
# Pallas kernel: pool -> backbone-linear(ReLU) -> fused(bottleneck+classifier) -> softmax
# ----------------------------------------------------------------------------
def dann_forward_kernel(x_ref, w0_ref, b0_ref, wf_ref, bf_ref, out_ref):
    # x_ref: [TILE_B, C, HW] f32 (one batch tile)
    x = x_ref[...]

    # Global average pool over spatial dims; the 1/(H*W) factor is pre-folded into w0,
    # so a plain sum (cross-lane reduce on the XLU) is enough here.
    pooled = jnp.sum(x, axis=-1)                                        # [TILE_B, C] f32

    # Stand-in backbone projection: Linear(C -> F0) + ReLU. bf16 operands, f32 acc (MXU).
    base = jnp.dot(pooled.astype(jnp.bfloat16), w0_ref[...],
                   preferred_element_type=jnp.float32) + b0_ref[...]
    base = jnp.maximum(base, 0.0)                                       # [TILE_B, F0] f32

    # Fused bottleneck + classifier (exact: no nonlinearity between the two Linears).
    logits = jnp.dot(base.astype(jnp.bfloat16), wf_ref[...],
                     preferred_element_type=jnp.float32) + bf_ref[...]  # [TILE_B, K_pad]

    # Numerically-stable softmax over the lane-padded class dim; padded lanes have
    # bias -1e30 -> exp underflows to exactly 0, so they contribute nothing.
    m = jnp.max(logits, axis=-1, keepdims=True)
    e = jnp.exp(logits - m)
    denom = jnp.sum(e, axis=-1, keepdims=True)
    out_ref[...] = e * pl.reciprocal(denom, approx=True)


# ----------------------------------------------------------------------------
# One-time parameter preparation (transpose / fuse / pad / cast) -- call at load time.
# ----------------------------------------------------------------------------
def prepare_params(params, hw, class_num, lane=LANE):
    # Backbone stand-in weight, transposed to [C, F0]; fold 1/(H*W) of the mean pool in.
    w0 = (params["w0"].T.astype(jnp.float32) / float(hw)).astype(jnp.bfloat16)   # [C, F0]
    b0 = params["b0"].astype(jnp.float32)[None, :]                               # [1, F0]

    # Fuse bottleneck_layer and classifier_layer into one GEMM.
    wb_t = params["wb"].T.astype(jnp.float32)            # [F0, Dbn]
    wc_t = params["wc"].T.astype(jnp.float32)            # [Dbn, K]
    w_fused = wb_t @ wc_t                                 # [F0, K]
    b_fused = params["bb"].astype(jnp.float32) @ wc_t + params["bc"].astype(jnp.float32)

    f0, k = w_fused.shape
    k_pad = ((k + lane - 1) // lane) * lane
    wf = jnp.zeros((f0, k_pad), jnp.float32).at[:, :k].set(w_fused).astype(jnp.bfloat16)
    # Padded class lanes get a huge negative bias so softmax assigns them zero mass.
    bf = jnp.full((1, k_pad), -1e30, jnp.float32).at[0, :k].set(b_fused)

    return {"w0": w0, "b0": b0, "wf": wf, "bf": bf, "class_num": class_num}


def _choose_tile_b(batch, c, hw):
    """Largest batch tile (multiple of 8, <=128) whose double-buffered x tile fits the
    VMEM budget; never larger than the 8-rounded batch (no pointless padding)."""
    per_row_bytes = 2 * c * hw * 4          # double-buffered f32 x rows
    t = X_TILE_VMEM_BUDGET // max(per_row_bytes, 1)
    t = int(max(TILE_B_MIN, min(TILE_B_MAX, (t // TILE_B_MIN) * TILE_B_MIN)))
    b8 = ((batch + TILE_B_MIN - 1) // TILE_B_MIN) * TILE_B_MIN
    return min(t, b8)


# ----------------------------------------------------------------------------
# Wrapper: batch padding, batch-tile grid, pallas_call
# ----------------------------------------------------------------------------
def dann_forward(x_nchw, prepared):
    B, C, H, W = x_nchw.shape
    hw = H * W
    x = x_nchw.reshape(B, C, hw).astype(jnp.float32)

    tile_b = _choose_tile_b(B, C, hw)
    b_pad = ((B + tile_b - 1) // tile_b) * tile_b
    if b_pad != B:
        x = jnp.pad(x, ((0, b_pad - B), (0, 0), (0, 0)))

    w0, b0, wf, bf = prepared["w0"], prepared["b0"], prepared["wf"], prepared["bf"]
    f0 = w0.shape[1]
    k_pad = wf.shape[1]
    n_tiles = b_pad // tile_b

    def rep(shape):  # weight/bias blocks replicated across the batch grid
        return pl.BlockSpec(shape, lambda b: tuple(0 for _ in shape))

    out = pl.pallas_call(
        dann_forward_kernel,
        out_shape=jax.ShapeDtypeStruct((b_pad, k_pad), jnp.float32),
        grid=(n_tiles,),
        in_specs=[
            pl.BlockSpec((tile_b, C, hw), lambda b: (b, 0, 0)),   # x: tiled over batch
            rep((C, f0)),        # w0 (bf16)
            rep((1, f0)),        # b0 (f32)
            rep((f0, k_pad)),    # fused weight (bf16)
            rep((1, k_pad)),     # fused bias   (f32, -1e30 in padded lanes)
        ],
        out_specs=pl.BlockSpec((tile_b, k_pad), lambda b: (b, 0)),
        compiler_params=pltpu.CompilerParams(dimension_semantics=("parallel",)),
    )(x, w0, b0, wf, bf)

    return out[:B, :prepared["class_num"]]


# ----------------------------------------------------------------------------
# Pure-JAX reference (unfused, f32) for sanity checking
# ----------------------------------------------------------------------------
def dann_forward_ref(x_nchw, params):
    B, C, H, W = x_nchw.shape
    pooled = jnp.mean(x_nchw.reshape(B, C, H * W), axis=-1)
    base = jnp.maximum(pooled @ params["w0"].T + params["b0"], 0.0)
    feats = base @ params["wb"].T + params["bb"]
    logits = feats @ params["wc"].T + params["bc"]
    return jax.nn.softmax(logits, axis=-1)


if __name__ == "__main__":
    # Small shapes consistent with the module's forward pass (NCHW input).
    B, C, H, W = 2, 4, 16, 16
    F0 = 128                    # stand-in backbone output dim (ResNet50 -> 2048 in real model)
    BOTTLENECK_DIM = 256
    CLASS_NUM = 31

    key = jax.random.PRNGKey(0)
    k_x, k_w0, k_wb, k_wc = jax.random.split(key, 4)

    x = jax.random.normal(k_x, (B, C, H, W), dtype=jnp.float32)

    params = {
        # stand-in backbone projection (deterministic synthetic init)
        "w0": 0.05 * jax.random.normal(k_w0, (F0, C), dtype=jnp.float32),
        "b0": jnp.zeros((F0,), dtype=jnp.float32),
        # bottleneck_layer: weight.normal_(0, 0.005), bias.fill_(0.1)
        "wb": 0.005 * jax.random.normal(k_wb, (BOTTLENECK_DIM, F0), dtype=jnp.float32),
        "bb": jnp.full((BOTTLENECK_DIM,), 0.1, dtype=jnp.float32),
        # classifier_layer: weight.normal_(0, 0.01), bias.fill_(0.0)
        "wc": 0.01 * jax.random.normal(k_wc, (CLASS_NUM, BOTTLENECK_DIM), dtype=jnp.float32),
        "bc": jnp.zeros((CLASS_NUM,), dtype=jnp.float32),
    }

    prepared = prepare_params(params, hw=H * W, class_num=CLASS_NUM)

    out = dann_forward(x, prepared)
    out = jax.block_until_ready(out)

    ref = dann_forward_ref(x, params)
    assert out.shape == (B, CLASS_NUM)
    # bf16 matmul operands + approx reciprocal -> loosened (but tight-for-bf16) tolerances.
    assert jnp.allclose(out, ref, atol=5e-3, rtol=2e-2), "mismatch vs JAX reference"
    assert jnp.allclose(jnp.sum(out, axis=-1), 1.0, atol=5e-3), "softmax rows must sum to 1"

    print("KERNEL_OK")
</pallas_src>

<mosaic_0001>
module attributes {stable_mosaic.version = 11 : i64} {
  func.func @dann_forward_kernel(%arg0: i32, %arg1: memref<8x4x256xf32, #tpu.memory_space<vmem>>, %arg2: memref<4x128xbf16, #tpu.memory_space<vmem>>, %arg3: memref<1x128xf32, #tpu.memory_space<vmem>>, %arg4: memref<128x128xbf16, #tpu.memory_space<vmem>>, %arg5: memref<1x128xf32, #tpu.memory_space<vmem>>, %arg6: memref<8x128xf32, #tpu.memory_space<vmem>>) attributes {dimension_semantics = [#tpu.dimension_semantics<parallel>], iteration_bounds = array<i64: 1>, scalar_prefetch = 0 : i64, scratch_operands = 0 : i64, tpu.core_type = #tpu.core_type<tc>, window_params = [{transform_indices = @transform_0, window_bounds = array<i64: 8, 4, 256>}, {pipeline_mode = #tpu.pipeline_mode<synchronous>, transform_indices = @transform_1, window_bounds = array<i64: 4, 128>}, {pipeline_mode = #tpu.pipeline_mode<synchronous>, transform_indices = @transform_2, window_bounds = array<i64: 1, 128>}, {pipeline_mode = #tpu.pipeline_mode<synchronous>, transform_indices = @transform_3, window_bounds = array<i64: 128, 128>}, {pipeline_mode = #tpu.pipeline_mode<synchronous>, transform_indices = @transform_4, window_bounds = array<i64: 1, 128>}, {transform_indices = @transform_5, window_bounds = array<i64: 8, 128>}]} {
    %c0 = arith.constant 0 : index
    %c0_0 = arith.constant 0 : index
    %c0_1 = arith.constant 0 : index
    %0 = vector.load %arg1[%c0, %c0_0, %c0_1] : memref<8x4x256xf32, #tpu.memory_space<vmem>>, vector<8x4x256xf32>
    %cst = arith.constant dense<0.000000e+00> : vector<8x4xf32>
    %1 = vector.multi_reduction <add>, %0, %cst [2] : vector<8x4x256xf32> to vector<8x4xf32>
    %2 = arith.truncf %1 : vector<8x4xf32> to vector<8x4xbf16>
    %c0_2 = arith.constant 0 : index
    %c0_3 = arith.constant 0 : index
    %3 = vector.load %arg2[%c0_2, %c0_3] : memref<4x128xbf16, #tpu.memory_space<vmem>>, vector<4x128xbf16>
    %cst_4 = arith.constant dense<0.000000e+00> : vector<8x128xf32>
    %4 = tpu.matmul %2, %3, %cst_4 {dimension_numbers = #tpu.dot_dimension_numbers<[1], [0], [0], [1], [0, 0, 1, 1], [], []>} : vector<8x4xbf16>, vector<4x128xbf16>, vector<8x128xf32> -> vector<8x128xf32>
    %c0_5 = arith.constant 0 : index
    %c0_6 = arith.constant 0 : index
    %5 = vector.load %arg3[%c0_5, %c0_6] : memref<1x128xf32, #tpu.memory_space<vmem>>, vector<1x128xf32>
    %6 = vector.broadcast %5 : vector<1x128xf32> to vector<8x128xf32>
    %7 = arith.addf %4, %6 : vector<8x128xf32>
    %cst_7 = arith.constant 0.000000e+00 : f32
    %8 = vector.broadcast %cst_7 : f32 to vector<8x128xf32>
    %9 = arith.maximumf %7, %8 : vector<8x128xf32>
    %10 = arith.truncf %9 : vector<8x128xf32> to vector<8x128xbf16>
    %c0_8 = arith.constant 0 : index
    %c0_9 = arith.constant 0 : index
    %11 = vector.load %arg4[%c0_8, %c0_9] : memref<128x128xbf16, #tpu.memory_space<vmem>>, vector<128x128xbf16>
    %cst_10 = arith.constant dense<0.000000e+00> : vector<8x128xf32>
    %12 = tpu.matmul %10, %11, %cst_10 {dimension_numbers = #tpu.dot_dimension_numbers<[1], [0], [0], [1], [0, 0, 1, 1], [], []>} : vector<8x128xbf16>, vector<128x128xbf16>, vector<8x128xf32> -> vector<8x128xf32>
    %c0_11 = arith.constant 0 : index
    %c0_12 = arith.constant 0 : index
    %13 = vector.load %arg5[%c0_11, %c0_12] : memref<1x128xf32, #tpu.memory_space<vmem>>, vector<1x128xf32>
    %14 = vector.broadcast %13 : vector<1x128xf32> to vector<8x128xf32>
    %15 = arith.addf %12, %14 : vector<8x128xf32>
    %cst_13 = arith.constant dense<0xFF800000> : vector<8xf32>
    %16 = vector.multi_reduction <maximumf>, %15, %cst_13 [1] : vector<8x128xf32> to vector<8xf32>
    %17 = vector.shape_cast %16 : vector<8xf32> to vector<8x1xf32>
    %18 = vector.broadcast %17 : vector<8x1xf32> to vector<8x128xf32>
    %19 = arith.subf %15, %18 : vector<8x128xf32>
    %20 = math.exp %19 : vector<8x128xf32>
    %cst_14 = arith.constant dense<0.000000e+00> : vector<8xf32>
    %21 = vector.multi_reduction <add>, %20, %cst_14 [1] : vector<8x128xf32> to vector<8xf32>
    %22 = vector.shape_cast %21 : vector<8xf32> to vector<8x1xf32>
    %23 = tpu.reciprocal %22 {approx = true} : vector<8x1xf32> -> vector<8x1xf32>
    %24 = vector.broadcast %23 : vector<8x1xf32> to vector<8x128xf32>
    %25 = arith.mulf %20, %24 : vector<8x128xf32>
    %c0_15 = arith.constant 0 : index
    %c0_16 = arith.constant 0 : index
    %26 = vector.load %arg6[%c0_15, %c0_16] : memref<8x128xf32, #tpu.memory_space<vmem>>, vector<8x128xf32>
    tpu.vector_store %arg6[%c0_15, %c0_16], %25 {strides = array<i32>} : memref<8x128xf32, #tpu.memory_space<vmem>>, vector<8x128xf32>,
    return
  }
  func.func @transform_0(%arg0: i32) -> (i32, i32, i32) {
    %c0_i32 = arith.constant 0 : i32
    %c0_i32_0 = arith.constant 0 : i32
    %c0_i32_1 = arith.constant 0 : i32
    return %arg0, %c0_i32, %c0_i32_0 : i32, i32, i32
  }
  func.func @transform_1(%arg0: i32) -> (i32, i32) {
    %c0_i32 = arith.constant 0 : i32
    %c0_i32_0 = arith.constant 0 : i32
    %c0_i32_1 = arith.constant 0 : i32
    return %c0_i32, %c0_i32_0 : i32, i32
  }
  func.func @transform_2(%arg0: i32) -> (i32, i32) {
    %c0_i32 = arith.constant 0 : i32
    %c0_i32_0 = arith.constant 0 : i32
    %c0_i32_1 = arith.constant 0 : i32
    return %c0_i32, %c0_i32_0 : i32, i32
  }
  func.func @transform_3(%arg0: i32) -> (i32, i32) {
    %c0_i32 = arith.constant 0 : i32
    %c0_i32_0 = arith.constant 0 : i32
    %c0_i32_1 = arith.constant 0 : i32
    return %c0_i32, %c0_i32_0 : i32, i32
  }
  func.func @transform_4(%arg0: i32) -> (i32, i32) {
    %c0_i32 = arith.constant 0 : i32
    %c0_i32_0 = arith.constant 0 : i32
    %c0_i32_1 = arith.constant 0 : i32
    return %c0_i32, %c0_i32_0 : i32, i32
  }
  func.func @transform_5(%arg0: i32) -> (i32, i32) {
    %c0_i32 = arith.constant 0 : i32
    %c0_i32_0 = arith.constant 0 : i32
    return %arg0, %c0_i32 : i32, i32
  }
}

</mosaic_0001>

<llo_original>
// kernel: tpu_custom_call.1
$region0: #{tpu_custom_call.1}
  #allocation0 [shape = 'u32[]', space=smem, size = 0x4, offset = 0x4, fixed_abs, tag = 'smem constant byte address 0x4 - core index']
  #allocation1 [shape = 'u32[72,128]{1,0:T(1,128)}', space=vmem, size = 0x9000, scoped, tag = 'internal scratch']
  %s0 = inlined_call_operand.hbm [shape: f32[8,4,256], index: 0, kind: input, shape index: {}]
  %s1 = inlined_call_operand.hbm [shape: bf16[4,128], index: 1, kind: input, shape index: {}]
  %s2 = inlined_call_operand.vmem [shape: f32[1,128], index: 2, kind: input, shape index: {}]
  %s3 = inlined_call_operand.hbm [shape: bf16[128,128], index: 3, kind: input, shape index: {}]
  %s4 = inlined_call_operand.vmem [shape: f32[1,128], index: 4, kind: input, shape index: {}]
  %s5 = inlined_call_operand.hbm [shape: f32[8,128], index: 5, kind: output, shape index: {}]
  %s6 = sld [smem:[#allocation0]]
  $region42: #{tpu_custom_call.1} parent=0
    _
  %s8 = ssub.s32 1, %s6
  %s9 = scalar_select 0, %s8, %s6
  $region1: #{tpu_custom_call.1} parent=0
    #allocation2 [shape = 'u8[32768]{0}', space=vmem, size = 0x8000, scoped, tag = 'input window, operand 0, single buffered']
    #allocation3 [shape = 's32[1]{0}', space=sflag, size = 0x4, scoped, tag = 'scoped memory for tpu_custom_call.1']
    #allocation4 [shape = 's32[1]{0}', space=sflag, size = 0x4, scoped, tag = 'scoped memory for tpu_custom_call.1']
    #allocation5 [shape = 'u8[1024]{0}', space=vmem, size = 0x400, scoped, tag = 'input window, operand 1, single buffered']
    #allocation6 [shape = 's32[1]{0}', space=sflag, size = 0x4, scoped, tag = 'scoped memory for tpu_custom_call.1']
    #allocation7 [shape = 'u8[32768]{0}', space=vmem, size = 0x8000, scoped, tag = 'input window, operand 3, single buffered']
    #allocation8 [shape = 'u8[4096]{0}', space=vmem, size = 0x1000, scoped, tag = 'output window, operand 0, single buffered']
    %10 = vsyncpa [#allocation3], 0
    %11 = vsyncpa [#allocation6], 0
    %12 = vsyncpa [#allocation4], 0
    // Predicated region
    $region2: #{tpu_custom_call.1} parent=1 // pred_check
      _
    $region3: #{tpu_custom_call.1} parent=1 // pred_check_branch
      %14 = sbr.rel (0) target = $region5
    $region4: #{tpu_custom_call.1} parent=1 // pred_region
      %16 = vsyncadd [#allocation3], 0
      %s17 = sshll.u32 %s0, 4
      %s18 = int_to_ptr.hbm [resolvable:$true] %s17
      %s19 = sshll.u32 [#allocation2], 4
      %s20 = int_to_ptr.vmem [resolvable:$true] %s19
      %25 = dma.hbm_to_vmem [thread:$0]  %s18, 1024, %s20, [#allocation3], 128, 128, 8
    $region5: #{tpu_custom_call.1} parent=1 // pred_fallthru
      _
    // Predicated region
    $region6: #{tpu_custom_call.1} parent=1 // pred_check
      _
    $region7: #{tpu_custom_call.1} parent=1 // pred_check_branch
      %27 = sbr.rel (0) target = $region9
    $region8: #{tpu_custom_call.1} parent=1 // pred_region
      %29 = vsyncadd [#allocation6], 0
      %s31 = sshll.u32 %s1, 4
      %s32 = int_to_ptr.hbm [resolvable:$true] %s31
      %s33 = sshll.u32 [#allocation5], 4
      %s34 = int_to_ptr.vmem [resolvable:$true] %s33
      %36 = dma.hbm_to_vmem [thread:$0]  %s32, 32, %s34, [#allocation6]
    $region9: #{tpu_custom_call.1} parent=1 // pred_fallthru
      _
    // Predicated region
    $region10: #{tpu_custom_call.1} parent=1 // pred_check
      _
    $region11: #{tpu_custom_call.1} parent=1 // pred_check_branch
      %38 = sbr.rel (0) target = $region13
    $region12: #{tpu_custom_call.1} parent=1 // pred_region
      _
    $region13: #{tpu_custom_call.1} parent=1 // pred_fallthru
      _
    // Predicated region
    $region14: #{tpu_custom_call.1} parent=1 // pred_check
      _
    $region15: #{tpu_custom_call.1} parent=1 // pred_check_branch
      %40 = sbr.rel (0) target = $region17
    $region16: #{tpu_custom_call.1} parent=1 // pred_region
      %42 = vsyncadd [#allocation6], 0
      %s43 = sshll.u32 %s3, 4
      %s44 = int_to_ptr.hbm [resolvable:$true] %s43
      %s45 = sshll.u32 [#allocation7], 4
      %s46 = int_to_ptr.vmem [resolvable:$true] %s45
      %51 = dma.hbm_to_vmem [thread:$0]  %s44, 1024, %s46, [#allocation6], 64, 64, 4
    $region17: #{tpu_custom_call.1} parent=1 // pred_fallthru
      _
    // Predicated region
    $region18: #{tpu_custom_call.1} parent=1 // pred_check
      _
    $region19: #{tpu_custom_call.1} parent=1 // pred_check_branch
      %53 = sbr.rel (0) target = $region21
    $region20: #{tpu_custom_call.1} parent=1 // pred_region
      _
    $region21: #{tpu_custom_call.1} parent=1 // pred_fallthru
      _
    // Predicated region
    $region22: #{tpu_custom_call.1} parent=1 // pred_check
      _
    $region23: #{tpu_custom_call.1} parent=1 // pred_check_branch
      %55 = sbr.rel (0) target = $region25
    $region24: #{tpu_custom_call.1} parent=1 // pred_region
      %57 = dma.done [#allocation3], 1024
    $region25: #{tpu_custom_call.1} parent=1 // pred_fallthru
      _
    // Predicated region
    $region26: #{tpu_custom_call.1} parent=1 // pred_check
      _
    $region27: #{tpu_custom_call.1} parent=1 // pred_check_branch
      %59 = sbr.rel (0) target = $region29
    $region28: #{tpu_custom_call.1} parent=1 // pred_region
      %61 = dma.done [#allocation6], 32
    $region29: #{tpu_custom_call.1} parent=1 // pred_fallthru
      _
    // Predicated region
    $region30: #{tpu_custom_call.1} parent=1 // pred_check
      _
    $region31: #{tpu_custom_call.1} parent=1 // pred_check_branch
      %63 = sbr.rel (0) target = $region33
    $region32: #{tpu_custom_call.1} parent=1 // pred_region
      %65 = dma.done [#allocation6], 1024
    $region33: #{tpu_custom_call.1} parent=1 // pred_fallthru
      _
    %v67 = vld [vmem:[#allocation2] sm:$0xff]
    %v68 = vld [vmem:[#allocation2 + $0x8] sm:$0xff]
    %v69 = vld [vmem:[#allocation2 + $0x10] sm:$0xff]
    %v70 = vld [vmem:[#allocation2 + $0x18] sm:$0xff]
    %v71 = vld [vmem:[#allocation2 + $0x20] sm:$0xff]
    %v72 = vld [vmem:[#allocation2 + $0x28] sm:$0xff]
    %v73 = vld [vmem:[#allocation2 + $0x30] sm:$0xff]
    %v74 = vld [vmem:[#allocation2 + $0x38] sm:$0xff]
    %83 = vst [vmem:[#allocation1] ss:$2 sm:$0xff] %v67
    %v84 = vld.sshfl [vmem:[#allocation1] sm:$0xff pattern:$0x75316420]
    %v85 = vld.sshfl [vmem:[#allocation1 + $0x8] sm:$0xff pattern:$0x75316420]
    %s86 = scalar_lea.vmem [#allocation1], 16
    %87 = vst [vmem:[%s86] ss:$2 sm:$0xff] %v68
    %v88 = vld.sshfl [vmem:[#allocation1 + $0x10] sm:$0xff pattern:$0x75316420]
    %v89 = vld.sshfl [vmem:[#allocation1 + $0x18] sm:$0xff pattern:$0x75316420]
    %s90 = scalar_lea.vmem [#allocation1], 32
    %91 = vst [vmem:[%s90] ss:$2 sm:$0xff] %v69
    %v92 = vld.sshfl [vmem:[#allocation1 + $0x20] sm:$0xff pattern:$0x75316420]
    %v93 = vld.sshfl [vmem:[#allocation1 + $0x28] sm:$0xff pattern:$0x75316420]
    %s94 = scalar_lea.vmem [#allocation1], 48
    %95 = vst [vmem:[%s94] ss:$2 sm:$0xff] %v70
    %v96 = vld.sshfl [vmem:[#allocation1 + $0x30] sm:$0xff pattern:$0x75316420]
    %v97 = vld.sshfl [vmem:[#allocation1 + $0x38] sm:$0xff pattern:$0x75316420]
    %98 = vst [vmem:[#allocation1] ss:$2 sm:$0xff] %v71
    %v99 = vld.sshfl [vmem:[#allocation1] sm:$0xff pattern:$0x75316420]
    %v100 = vld.sshfl [vmem:[#allocation1 + $0x8] sm:$0xff pattern:$0x75316420]
    %101 = vst [vmem:[%s86] ss:$2 sm:$0xff] %v72
    %v102 = vld.sshfl [vmem:[#allocation1 + $0x10] sm:$0xff pattern:$0x75316420]
    %v103 = vld.sshfl [vmem:[#allocation1 + $0x18] sm:$0xff pattern:$0x75316420]
    %104 = vst [vmem:[%s90] ss:$2 sm:$0xff] %v73
    %v105 = vld.sshfl [vmem:[#allocation1 + $0x20] sm:$0xff pattern:$0x75316420]
    %v106 = vld.sshfl [vmem:[#allocation1 + $0x28] sm:$0xff pattern:$0x75316420]
    %107 = vst [vmem:[%s94] ss:$2 sm:$0xff] %v74
    %v108 = vld.sshfl [vmem:[#allocation1 + $0x30] sm:$0xff pattern:$0x75316420]
    %v109 = vld.sshfl [vmem:[#allocation1 + $0x38] sm:$0xff pattern:$0x75316420]
    %vm126 = vcmask 1043456
    %v127 = vsel %vm126, %v84, 0.0
    %v128 = vsel %vm126, %v85, 0.0
    %v129 = vadd.f32 %v127, %v128
    %130 = vadd.xlane.f32.xlu0 %v129
    %v131 = vpop.xlane.xlu0 %130
    %v132 = vsel %vm126, %v88, 0.0
    %v133 = vsel %vm126, %v89, 0.0
    %v134 = vadd.f32 %v132, %v133
    %135 = vadd.xlane.f32.xlu0 %v134
    %v136 = vpop.xlane.xlu0 %135
    %v137 = vsel %vm126, %v92, 0.0
    %v138 = vsel %vm126, %v93, 0.0
    %v139 = vadd.f32 %v137, %v138
    %140 = vadd.xlane.f32.xlu0 %v139
    %v141 = vpop.xlane.xlu0 %140
    %v142 = vsel %vm126, %v96, 0.0
    %v143 = vsel %vm126, %v97, 0.0
    %v144 = vadd.f32 %v142, %v143
    %145 = vadd.xlane.f32.xlu0 %v144
    %v146 = vpop.xlane.xlu0 %145
    %v147 = vsel %vm126, %v99, 0.0
    %v148 = vsel %vm126, %v100, 0.0
    %v149 = vadd.f32 %v147, %v148
    %150 = vadd.xlane.f32.xlu0 %v149
    %v151 = vpop.xlane.xlu0 %150
    %v152 = vsel %vm126, %v102, 0.0
    %v153 = vsel %vm126, %v103, 0.0
    %v154 = vadd.f32 %v152, %v153
    %155 = vadd.xlane.f32.xlu0 %v154
    %v156 = vpop.xlane.xlu0 %155
    %v157 = vsel %vm126, %v105, 0.0
    %v158 = vsel %vm126, %v106, 0.0
    %v159 = vadd.f32 %v157, %v158
    %160 = vadd.xlane.f32.xlu0 %v159
    %v161 = vpop.xlane.xlu0 %160
    %v162 = vsel %vm126, %v108, 0.0
    %v163 = vsel %vm126, %v109, 0.0
    %v164 = vadd.f32 %v162, %v163
    %165 = vadd.xlane.f32.xlu0 %v164
    %v166 = vpop.xlane.xlu0 %165
    %v167 = vpack.c.bf16 %v131, %v131
    %v168 = vpack.c.bf16 %v136, %v136
    %v169 = vpack.c.bf16 %v141, %v141
    %v170 = vpack.c.bf16 %v146, %v146
    %v171 = vpack.c.bf16 %v151, %v151
    %v172 = vpack.c.bf16 %v156, %v156
    %v173 = vpack.c.bf16 %v161, %v161
    %v174 = vpack.c.bf16 %v166, %v166
    %v175 = vld [vmem:[#allocation5] sm:$0x3]
    %v176 = vld [vmem:[%s2] sm:$0x1]
    %v178 = vperm.slane %v176, 0
    %v188 = vunpack.c.l.b16 %v167
    %v189 = vunpack.c.l.b16 %v168
    %v190 = vunpack.c.l.b16 %v169
    %v191 = vunpack.c.l.b16 %v170
    %v192 = vunpack.c.l.b16 %v171
    %v193 = vunpack.c.l.b16 %v172
    %v194 = vunpack.c.l.b16 %v173
    %v195 = vunpack.c.l.b16 %v174
    %v196 = vlaneseq
    %v197 = vand.u32 %v196, 127
    %v198 = vperm.slane %v188, %v197
    %v199 = vperm.slane %v189, %v197
    %v200 = vperm.slane %v190, %v197
    %v201 = vperm.slane %v191, %v197
    %v202 = vperm.slane %v192, %v197
    %v203 = vperm.slane %v193, %v197
    %v204 = vperm.slane %v194, %v197
    %v205 = vperm.slane %v195, %v197
    %vm206 = vcmask 1041409
    %v207 = vsel %vm206, %v199, %v198
    %vm208 = vcmask 1042434
    %v209 = vsel %vm208, %v200, %v207
    %vm210 = vcmask 1043459
    %v211 = vsel %vm210, %v201, %v209
    %vm212 = vcmask 1044484
    %v213 = vsel %vm212, %v202, %v211
    %vm214 = vcmask 1045509
    %v215 = vsel %vm214, %v203, %v213
    %vm216 = vcmask 1046534
    %v217 = vsel %vm216, %v204, %v215
    %vm218 = vcmask 1047559
    %v219 = vsel %vm218, %v205, %v217
    %v220 = vpack.c.b16 %v219, %v219
    %vm221 = vcmask 31744
    %v223 = vsel %vm221, %v220, 0
    %vm225 = vcmask 1041408
    %v227 = vsel %vm225, %v175, 0
    %229 = vmatpush.bf16.msra.mxu0 0
    %230 = vmatpush.bf16.msra.mxu0 0
    %231 = vmatpush.bf16.msra.mxu0 0
    %232 = vmatpush.bf16.msra.mxu0 0
    %233 = vmatpush.bf16.msra.mxu0 0
    %234 = vmatpush.bf16.msra.mxu0 0
    %235 = vmatpush.bf16.msra.mxu0 0
    %236 = vmatpush.bf16.msra.mxu0 %v227
    %237 = vmatmul.bf16.gmra.mxu0 %v223
    %v238 = vpop.f32.mrf.mxu0
    %v239 = vadd.f32 %v178, %v238
    %v240 = vpop.f32.mrf.mxu0
    %241 = vdwg.mxu0
    %v242 = vmax.f32 %v239, 0.0
    %v243 = vpack.c.bf16 %v242, %v242
    %v244 = vld [vmem:[#allocation7] sm:$0xf]
    %v245 = vld [vmem:[#allocation7 + $0x4] sm:$0xf]
    %v246 = vld [vmem:[#allocation7 + $0x8] sm:$0xf]
    %v247 = vld [vmem:[#allocation7 + $0xc] sm:$0xf]
    %v248 = vld [vmem:[#allocation7 + $0x10] sm:$0xf]
    %v249 = vld [vmem:[#allocation7 + $0x14] sm:$0xf]
    %v250 = vld [vmem:[#allocation7 + $0x18] sm:$0xf]
    %v251 = vld [vmem:[#allocation7 + $0x1c] sm:$0xf]
    %v252 = vld [vmem:[#allocation7 + $0x20] sm:$0xf]
    %v253 = vld [vmem:[#allocation7 + $0x24] sm:$0xf]
    %v254 = vld [vmem:[#allocation7 + $0x28] sm:$0xf]
    %v255 = vld [vmem:[#allocation7 + $0x2c] sm:$0xf]
    %v256 = vld [vmem:[#allocation7 + $0x30] sm:$0xf]
    %v257 = vld [vmem:[#allocation7 + $0x34] sm:$0xf]
    %v258 = vld [vmem:[#allocation7 + $0x38] sm:$0xf]
    %v259 = vld [vmem:[#allocation7 + $0x3c] sm:$0xf]
    %v260 = vld [vmem:[%s4] sm:$0x1]
    %v262 = vperm.slane %v260, 0
    %v280 = vunpack.c.l.b16 %v244
    %v281 = vunpack.c.l.b16 %v245
    %v282 = vunpack.c.l.b16 %v246
    %v283 = vunpack.c.l.b16 %v247
    %v284 = vunpack.c.l.b16 %v248
    %v285 = vunpack.c.l.b16 %v249
    %v286 = vunpack.c.l.b16 %v250
    %v287 = vunpack.c.l.b16 %v251
    %v288 = vunpack.c.l.b16 %v252
    %v289 = vunpack.c.l.b16 %v253
    %v290 = vunpack.c.l.b16 %v254
    %v291 = vunpack.c.l.b16 %v255
    %v292 = vunpack.c.l.b16 %v256
    %v293 = vunpack.c.l.b16 %v257
    %v294 = vunpack.c.l.b16 %v258
    %v295 = vunpack.c.l.b16 %v259
    %v296 = vpack.c.b16 %v281, %v280
    %v297 = vpack.c.b16 %v283, %v282
    %v298 = vpack.c.b16 %v285, %v284
    %v299 = vpack.c.b16 %v287, %v286
    %v300 = vpack.c.b16 %v289, %v288
    %v301 = vpack.c.b16 %v291, %v290
    %v302 = vpack.c.b16 %v293, %v292
    %v303 = vpack.c.b16 %v295, %v294
    %312 = vmatpush.bf16.msra.mxu0 %v303
    %313 = vmatpush.bf16.msra.mxu0 %v302
    %314 = vmatpush.bf16.msra.mxu0 %v301
    %315 = vmatpush.bf16.msra.mxu0 %v300
    %316 = vmatpush.bf16.msra.mxu0 %v299
    %317 = vmatpush.bf16.msra.mxu0 %v298
    %318 = vmatpush.bf16.msra.mxu0 %v297
    %319 = vmatpush.bf16.msra.mxu0 %v296
    %320 = vmatmul.bf16.gmra.mxu0 %v243
    %v321 = vpop.f32.mrf.mxu0
    %v322 = vadd.f32 %v262, %v321
    %v323 = vpop.f32.mrf.mxu0
    %324 = vdwg.mxu0
    %325 = vmax.xlane.f32.xlu0 %v322
    %v326 = vpop.xlane.xlu0 %325
    %v327 = vsub.f32 %v322, %v326
    %v328 = vmul.f32 %v327, 1.442695
    %v329 = vpow.pop %v328
    %330 = vadd.xlane.f32.xlu0 %v329
    %v331 = vpop.xlane.xlu0 %330
    %v332 = vrcp.pop %v331
    %v333 = vmul.f32 %v329, %v332
    %334 = vst [vmem:[#allocation8] sm:$0xff] %v333
    // Predicated region
    $region34: #{tpu_custom_call.1} parent=1 // pred_check
      _
    $region35: #{tpu_custom_call.1} parent=1 // pred_check_branch
      %336 = sbr.rel (0) target = $region37
    $region36: #{tpu_custom_call.1} parent=1 // pred_region
      %338 = vsyncadd [#allocation4], 0
      %s340 = sshll.u32 [#allocation8], 4
      %s341 = int_to_ptr.vmem [resolvable:$true] %s340
      %s342 = sshll.u32 %s5, 4
      %s343 = int_to_ptr.hbm [resolvable:$true] %s342
      %345 = dma.vmem_to_hbm [thread:$0]  %s341, 128, %s343, [#allocation4]
    $region37: #{tpu_custom_call.1} parent=1 // pred_fallthru
      _
    // Predicated region
    $region38: #{tpu_custom_call.1} parent=1 // pred_check
      _
    $region39: #{tpu_custom_call.1} parent=1 // pred_check_branch
      %347 = sbr.rel (0) target = $region41
    $region40: #{tpu_custom_call.1} parent=1 // pred_region
      %349 = dma.done [#allocation4], 128
    $region41: #{tpu_custom_call.1} parent=1 // pred_fallthru
      _
    %350 = vsyncpa [#allocation3], 1
    %351 = vsyncpa [#allocation6], 1
    %352 = vsyncpa [#allocation4], 1

</llo_original>
